<compile_context>
chip_gen: v5e
topology: v5e:2x2
jax: 0.10.0
libtpu: 0.0.40
codegen_flags: <defaults>
</compile_context>

<pallas_src>
import jax
import jax.numpy as jnp
from jax.experimental import pallas as pl
from jax.experimental.pallas import tpu as pltpu

_LANES = 128                # lane-dense last dim = one full vreg lane width
_MAX_BLOCK_ROWS = 8192      # 8192 x 128 f32 = 4 MiB block (8 MiB double-buffered)
_SMALL_N_THRESHOLD = 65536  # below this, a plain XLA broadcast wins


def _round_up(x: int, m: int) -> int:
    return ((x + m - 1) // m) * m


def _single_variance_kernel(var_ref, o_ref):
    # var_ref: SMEM, shape (1,) f32 -- the learnable scalar `variance`
    # o_ref:   VMEM, shape (block_rows, _LANES) f32 output tile
    # Scalar exp rides the otherwise-idle EUP slot -> free per grid step.
    s = jnp.exp(var_ref[0] * 10.0)
    o_ref[...] = jnp.full(o_ref.shape, s, dtype=o_ref.dtype)


def single_variance_forward(x: jax.Array, variance,
                            *, small_n_threshold: int = _SMALL_N_THRESHOLD) -> jax.Array:
    """Pallas equivalent of SingleVarianceNetwork.forward.

    Args:
      x:        (N, ...) array; only its leading dimension is used.
      variance: scalar float32 parameter.
      small_n_threshold: below this N, use a plain XLA broadcast (no kernel).

    Returns:
      (N, 1) float32 array filled with exp(variance * 10).
    """
    n = x.shape[0]
    var_arr = jnp.asarray(variance, dtype=jnp.float32).reshape((1,))

    if n == 0:
        return jnp.zeros((0, 1), dtype=jnp.float32)

    # Small-N fast path: kernel launch + slab padding would dominate; a plain
    # broadcast writes exactly N*4 bytes.
    if n < small_n_threshold:
        return jnp.full((n, 1), jnp.exp(var_arr[0] * 10.0), dtype=jnp.float32)

    # Lane-dense slab geometry: n elements laid out row-major as (rows_pad, 128).
    rows = pl.cdiv(n, _LANES)                              # logical rows of 128 lanes
    rows8 = _round_up(rows, 8)                             # sublane alignment
    num_blocks = pl.cdiv(rows8, _MAX_BLOCK_ROWS)
    block_rows = _round_up(pl.cdiv(rows8, num_blocks), 8)  # balanced blocks, <8 rows waste each
    rows_pad = num_blocks * block_rows

    slab = pl.pallas_call(
        _single_variance_kernel,
        out_shape=jax.ShapeDtypeStruct((rows_pad, _LANES), jnp.float32),
        grid=(num_blocks,),
        in_specs=[pl.BlockSpec(memory_space=pltpu.MemorySpace.SMEM)],
        out_specs=pl.BlockSpec((block_rows, _LANES), lambda i: (i, 0)),
        compiler_params=pltpu.CompilerParams(
            dimension_semantics=("parallel",)),
    )(var_arr)

    if rows_pad * _LANES == n:
        # Exact-size slab: row-major (rows_pad, 128) -> (n, 1) is a free bitcast.
        return slab.reshape(n, 1)
    # Ragged N: slice off the (<1024-element) tail, then view as (n, 1).
    return slab.reshape(-1)[:n].reshape(n, 1)


if __name__ == "__main__":
    key = jax.random.PRNGKey(0)

    # Deterministic parameter init, mirroring __init__(init_val).
    init_val = 0.3
    variance = jnp.float32(init_val)
    expected = jnp.exp(variance * 10.0)

    # 1) Tiny batch -> small-N fast path (plain broadcast), same semantics.
    x_small = jax.random.normal(key, (8, 3), dtype=jnp.float32)
    out_small = jax.block_until_ready(single_variance_forward(x_small, variance))
    ref_small = jnp.ones((8, 1), dtype=jnp.float32) * expected
    assert out_small.shape == (8, 1), out_small.shape
    assert out_small.dtype == jnp.float32, out_small.dtype
    assert jnp.allclose(out_small, ref_small, rtol=1e-6, atol=1e-6)

    # 2) Force the Pallas kernel path with an exact-size slab (zero-copy reshape).
    #    n = 8192 -> rows = 64, rows_pad = 64, rows_pad * 128 == n.
    x_exact = jax.random.normal(key, (8192, 3), dtype=jnp.float32)
    out_exact = jax.block_until_ready(
        single_variance_forward(x_exact, variance, small_n_threshold=0))
    ref_exact = jnp.ones((8192, 1), dtype=jnp.float32) * expected
    assert out_exact.shape == (8192, 1), out_exact.shape
    assert jnp.allclose(out_exact, ref_exact, rtol=1e-6, atol=1e-6)

    # 3) Force the kernel path with a ragged N (exercises padding + tail slice).
    x_pad = jax.random.normal(key, (3000, 3), dtype=jnp.float32)
    out_pad = jax.block_until_ready(
        single_variance_forward(x_pad, variance, small_n_threshold=0))
    ref_pad = jnp.ones((3000, 1), dtype=jnp.float32) * expected
    assert out_pad.shape == (3000, 1), out_pad.shape
    assert jnp.allclose(out_pad, ref_pad, rtol=1e-6, atol=1e-6)

    print("KERNEL_OK")
</pallas_src>

<mosaic_0001>
module attributes {stable_mosaic.version = 11 : i64} {
  func.func @_single_variance_kernel(%arg0: i32, %arg1: memref<1xf32, #tpu.memory_space<smem>>, %arg2: memref<64x128xf32, #tpu.memory_space<vmem>>) attributes {dimension_semantics = [#tpu.dimension_semantics<parallel>], iteration_bounds = array<i64: 1>, scalar_prefetch = 0 : i64, scratch_operands = 0 : i64, tpu.core_type = #tpu.core_type<tc>, window_params = [{transform_indices = @transform_0, window_bounds = array<i64: 1>}, {transform_indices = @transform_1, window_bounds = array<i64: 64, 128>}]} {
    %c0 = arith.constant 0 : index
    %0 = memref.load %arg1[%c0] : memref<1xf32, #tpu.memory_space<smem>>
    %cst = arith.constant 1.000000e+01 : f32
    %1 = arith.mulf %0, %cst : f32
    %2 = math.exp %1 : f32
    %3 = vector.broadcast %2 : f32 to vector<64x128xf32>
    %c0_0 = arith.constant 0 : index
    %c0_1 = arith.constant 0 : index
    %4 = vector.load %arg2[%c0_0, %c0_1] : memref<64x128xf32, #tpu.memory_space<vmem>>, vector<64x128xf32>
    tpu.vector_store %arg2[%c0_0, %c0_1], %3 {strides = array<i32>} : memref<64x128xf32, #tpu.memory_space<vmem>>, vector<64x128xf32>,
    return
  }
  func.func @transform_0(%arg0: i32) -> i32 {
    %c0_i32 = arith.constant 0 : i32
    %c0_i32_0 = arith.constant 0 : i32
    return %c0_i32 : i32
  }
  func.func @transform_1(%arg0: i32) -> (i32, i32) {
    %c0_i32 = arith.constant 0 : i32
    %c0_i32_0 = arith.constant 0 : i32
    return %arg0, %c0_i32 : i32, i32
  }
}

</mosaic_0001>

<llo_original>
// kernel: tpu_custom_call.1
$region0: #{tpu_custom_call.1}
  #allocation0 [shape = 'u32[]', space=smem, size = 0x4, offset = 0x4, fixed_abs, tag = 'smem constant byte address 0x4 - core index']
  #allocation1 [shape = 'u32[72,128]{1,0:T(1,128)}', space=vmem, size = 0x9000, scoped, tag = 'internal scratch']
  #allocation2 [shape = 'f32[1]{0:T(128)S(6)}', space=smem, size = 0x200, scoped, tag = 'scoped memory for tpu_custom_call.1']
  %s0 = inlined_call_operand.<no memory space> [shape: f32[1], index: 0, kind: input, shape index: {}]
  %s1 = inlined_call_operand.hbm [shape: f32[64,128], index: 1, kind: output, shape index: {}]
  %s2 = sld [smem:[#allocation0]]
  $region14: #{tpu_custom_call.1} parent=0
    _
  %s4 = ssub.s32 1, %s2
  %s5 = scalar_select 0, %s4, %s2
  %6 = sst [smem:[#allocation2]] %s0
  $region1: #{tpu_custom_call.1} parent=0
    #allocation3 [shape = 'u8[32768]{0}', space=vmem, size = 0x8000, scoped, tag = 'output window, operand 0, single buffered']
    #allocation4 [shape = 's32[1]{0}', space=sflag, size = 0x4, scoped, tag = 'scoped memory for tpu_custom_call.1']
    %7 = vsyncpa [#allocation4], 0
    // Predicated region
    $region2: #{tpu_custom_call.1} parent=1 // pred_check
      _
    $region3: #{tpu_custom_call.1} parent=1 // pred_check_branch
      %9 = sbr.rel (0) target = $region5
    $region4: #{tpu_custom_call.1} parent=1 // pred_region
      _
    $region5: #{tpu_custom_call.1} parent=1 // pred_fallthru
      _
    %s10 = sld [smem:[#allocation2]]
    %s11 = smul.f32 %s10, 10.0
    %v12 = vstv %s11
    %v13 = vmul.f32 %v12, 1.442695
    %v14 = vpow.pop %v13
    %s15 = vtos %v14
    %v16 = vstv %s15
    %17 = vst [vmem:[#allocation3] sm:$0xff] %v16
    %18 = vst [vmem:[#allocation3 + $0x8] sm:$0xff] %v16
    %19 = vst [vmem:[#allocation3 + $0x10] sm:$0xff] %v16
    %20 = vst [vmem:[#allocation3 + $0x18] sm:$0xff] %v16
    %21 = vst [vmem:[#allocation3 + $0x20] sm:$0xff] %v16
    %22 = vst [vmem:[#allocation3 + $0x28] sm:$0xff] %v16
    %23 = vst [vmem:[#allocation3 + $0x30] sm:$0xff] %v16
    %24 = vst [vmem:[#allocation3 + $0x38] sm:$0xff] %v16
    // Predicated region
    $region6: #{tpu_custom_call.1} parent=1 // pred_check
      _
    $region7: #{tpu_custom_call.1} parent=1 // pred_check_branch
      %26 = sbr.rel (0) target = $region9
    $region8: #{tpu_custom_call.1} parent=1 // pred_region
      %28 = vsyncadd [#allocation4], 0
      %s29 = sshll.u32 [#allocation3], 4
      %s30 = int_to_ptr.vmem [resolvable:$true] %s29
      %s31 = sshll.u32 %s1, 4
      %s32 = int_to_ptr.hbm [resolvable:$true] %s31
      %37 = dma.vmem_to_hbm [thread:$0]  %s30, 1024, %s32, [#allocation4], 128, 128, 8
    $region9: #{tpu_custom_call.1} parent=1 // pred_fallthru
      _
    // Predicated region
    $region10: #{tpu_custom_call.1} parent=1 // pred_check
      _
    $region11: #{tpu_custom_call.1} parent=1 // pred_check_branch
      %39 = sbr.rel (0) target = $region13
    $region12: #{tpu_custom_call.1} parent=1 // pred_region
      %41 = dma.done [#allocation4], 1024
    $region13: #{tpu_custom_call.1} parent=1 // pred_fallthru
      _
    %42 = vsyncpa [#allocation4], 1

</llo_original>
